<compile_context>
chip_gen: v5e
topology: v5e:2x2
jax: 0.10.0
libtpu: 0.0.40
codegen_flags: <defaults>
</compile_context>

<pallas_src>
import functools

import jax
import jax.numpy as jnp
from jax.experimental import pallas as pl
from jax.experimental.pallas import tpu as pltpu

# ---- small-model hyperparameters (BART-base uses D=768, vocab=~21128) ------
D     = 256   # hidden size
VOCAB = 512   # tokenizer.vocab_size surrogate
NCLS  = 3     # fc output classes

# Vocab tile width for the big projection.  At this toy size (V=512, w_lin is
# only ~256 KiB in bf16) the whole projection fits VMEM on every generation,
# so TV = VOCAB collapses the vocab grid to a single step.
# At real BART sizes (D=768, V~21k-50k) re-derive TV against VMEM:
#   - v5e/v6e (128 MiB physical): TV ~ 8192, and raise
#     CompilerParams(vmem_limit_bytes=~64<<20) above the 32 MiB scoped default.
#   - v7x (64 MiB physical): TV ~ 4096 (double-buffered bf16 weight tile
#     ~12 MiB), vmem_limit_bytes ~ 40-48 MiB, leaving headroom for mv2/bias/
#     pred tiles.
TV = VOCAB

# Row tile (over B*L rows) for the training head: gives the leading "parallel"
# grid axis that keeps the second v7x TensorCore busy at real batch sizes.
# Kept a multiple of the span length so the fc head / clf CE are local to a
# row tile; at the toy size it collapses to a single tile.
ROW_TILE_ROWS = 256

# Eval predictions dtype.  bf16 halves the dominant [B*L, V] HBM write at real
# sizes (accumulation is still f32).  Set to jnp.float32 only if a downstream
# consumer strictly needs full precision.
PRED_DTYPE = jnp.bfloat16

# TODO(synk): at real vocab sizes, store w_lin quantized (int8 + per-column
# scales on v5e/v6e; fp8-e4m3 on v7x, whose MXU has no integer path) to halve
# the dominant weight byte-stream; not done here (accuracy-dependent).


def prepare_params(emb, w_fc, b_fc, w_lin, b_lin):
    """One-time conversion of the matmul weights to bf16 (persistent storage).

    Keeping w_fc / w_lin in bf16 between steps removes the per-forward
    f32->bf16 convert, which at real BART sizes reads/writes more HBM than the
    head kernel itself.  Biases stay f32 (added onto f32 accumulators).
    """
    return (emb, w_fc.astype(jnp.bfloat16), b_fc,
            w_lin.astype(jnp.bfloat16), b_lin)


def _as_bf16(x):
    # Identity when params are already bf16 (see prepare_params); emits no op.
    return x if x.dtype == jnp.bfloat16 else x.astype(jnp.bfloat16)


# ---------------------------------------------------------------------------
# Shared in-kernel helper: mean over each length-`span` row group, fc,
# LeakyReLU.  The mean-pool is expressed as a tiny [nb, nb*span] x
# [nb*span, D] MXU matmul so no reshape / cross-lane reduce is needed on the
# merged-row layout.  `nb` batch elements live in this row tile.
# Dropout(0.2) acts as identity (eval-mode semantics).
# ---------------------------------------------------------------------------
def _fc_head(mv_tile, wfc, bfc, nb, span):
    rows = nb * span
    row = jax.lax.broadcasted_iota(jnp.int32, (nb, rows), 0)
    col = jax.lax.broadcasted_iota(jnp.int32, (nb, rows), 1)
    sel = (col >= row * span) & (col < (row + 1) * span)
    avg = jnp.where(sel, 1.0, 0.0).astype(jnp.bfloat16)             # [nb, rows]
    pooled = jnp.dot(avg, mv_tile,
                     preferred_element_type=jnp.float32) * (1.0 / span)  # [nb, D]
    z = jnp.dot(pooled.astype(jnp.bfloat16), wfc,
                preferred_element_type=jnp.float32) + bfc            # [nb, NCLS]
    # LeakyReLU(negative_slope=0.2); Dropout(0.2) == identity in eval semantics.
    # TODO(synk): nn.Dropout(0.2) train-mode random masking is not reproduced.
    return jnp.where(z >= 0.0, z, 0.2 * z)


# ---------------------------------------------------------------------------
# Kernel 1 (eval): PERE head.
#   mask_vector [B*L, D] ->
#     logits      = LeakyReLU_{0.2}( mean_L(mask_vector) @ W_fc + b_fc )  [B, 3]
#     predictions = mask_vector @ W_lin + b_lin                           [B*L, V]
# Grid tiles the vocab dimension ("parallel": each vocab tile is independent,
# so v7x's two TensorCores split the projection).  The tiny fc head is
# computed unconditionally every step so the grid-resident logits block is
# valid on whichever core writes it back.
# ---------------------------------------------------------------------------
def head_eval_kernel(mv_ref, wfc_ref, bfc_ref, wlin_ref, blin_ref,
                     logits_ref, pred_ref, *, bsz, span):
    mv2 = mv_ref[...]                                                # [B*L, D] bf16

    # fc head: two tiny MXU matmuls -> free filler under the HBM-bound weight
    # stream; no pl.when gate so the parallel vocab axis stays race-free.
    logits_ref[...] = _fc_head(mv2, wfc_ref[...], bfc_ref[...], bsz, span)

    # big LM-head projection: [B*L, D] x [D, TV] MXU matmul, f32 accumulation,
    # bf16 store (halves the dominant HBM write at real sizes).
    pred_ref[...] = (jnp.dot(mv2, wlin_ref[...],
                             preferred_element_type=jnp.float32)
                     + blin_ref[...]).astype(pred_ref.dtype)


def pere_head_eval(mask_vector, w_fc, b_fc, w_lin, b_lin):
    B, L, d = mask_vector.shape
    BL = B * L
    V = w_lin.shape[1]
    tv = min(TV, V)
    assert d == D and V % tv == 0
    nv = V // tv
    mv2 = mask_vector.reshape(BL, d).astype(jnp.bfloat16)
    wfc = _as_bf16(w_fc)
    wlin = _as_bf16(w_lin)

    wlin_spec = pl.BlockSpec((d, tv), lambda j: (0, j))
    if nv >= 3:
        # Deep vocab grid at real sizes: triple-buffer the weight stream so
        # DMA start/finish jitter never exposes (per-step compute is tiny).
        wlin_spec = pl.BlockSpec((d, tv), lambda j: (0, j),
                                 pipeline_mode=pl.Buffered(3))

    pred_itemsize = 2 if PRED_DTYPE == jnp.bfloat16 else 4
    cost = pl.CostEstimate(
        flops=2 * BL * d * V + (2 * B * BL * d + 2 * B * d * NCLS) * nv,
        transcendentals=0,
        bytes_accessed=(d * V * 2 + V * 4            # w_lin (bf16) + b_lin (f32)
                        + BL * d * 2 * nv            # mv re-read per vocab tile
                        + BL * V * pred_itemsize     # predictions writeback
                        + B * NCLS * 4 + d * NCLS * 2))

    logits, pred = pl.pallas_call(
        functools.partial(head_eval_kernel, bsz=B, span=L),
        grid=(nv,),
        in_specs=[
            pl.BlockSpec((BL, d),   lambda j: (0, 0)),
            pl.BlockSpec((d, NCLS), lambda j: (0, 0)),
            pl.BlockSpec((1, NCLS), lambda j: (0, 0)),
            wlin_spec,
            pl.BlockSpec((1, tv),   lambda j: (0, j)),
        ],
        out_specs=[
            pl.BlockSpec((B, NCLS), lambda j: (0, 0)),
            pl.BlockSpec((BL, tv),  lambda j: (0, j)),   # lane-dense store
        ],
        out_shape=[
            jax.ShapeDtypeStruct((B, NCLS), jnp.float32),
            jax.ShapeDtypeStruct((BL, V), PRED_DTYPE),
        ],
        cost_estimate=cost,
        compiler_params=pltpu.CompilerParams(
            dimension_semantics=("parallel",)),
    )(mv2, wfc, b_fc, wlin, b_lin)
    return logits, pred.reshape(B, L, V)


# ---------------------------------------------------------------------------
# Kernel 2 (train): fused head + both cross-entropy NLLs.
#   - mask CE: online (flash-style) log-sum-exp over the vocab grid axis with
#     running max / sum-exp / target-logit accumulators in VMEM scratch, so
#     predictions [B*L, V] are never written to HBM.
#   - clf CE: computed at vocab tile 0 of each row tile from the fc-head
#     logits (row tiles are span-aligned, so the pooling stays local).
# Grid: (row tiles over B*L  [parallel],  vocab tiles  [arbitrary]).
# The vocab axis must stay "arbitrary": the m/l/t scratch carry is sequential.
# Outputs per-row NLLs; the mean + 0.7/0.3 combine happens in the wrapper
# (<= B*L scalars; nn.CrossEntropyLoss(reduction='mean'), no ignore_index).
# ---------------------------------------------------------------------------
def head_train_kernel(mv_ref, tok_ref, tgt_ref, wfc_ref, bfc_ref,
                      wlin_ref, blin_ref,
                      clf_nll_ref, mask_nll_ref,
                      m_sc, l_sc, t_sc, *, span):
    j = pl.program_id(1)
    nv = pl.num_programs(1)
    mv2 = mv_ref[...]                                            # [tr, D] bf16
    tr = mv2.shape[0]
    nb = tr // span

    @pl.when(j == 0)
    def _():
        # init online-LSE accumulators for this row tile
        m_sc[...] = jnp.full(m_sc.shape, -jnp.inf, m_sc.dtype)
        l_sc[...] = jnp.zeros(l_sc.shape, l_sc.dtype)
        t_sc[...] = jnp.zeros(t_sc.shape, t_sc.dtype)
        # classification head + its cross-entropy NLL (local to this row tile)
        z = _fc_head(mv2, wfc_ref[...], bfc_ref[...], nb, span)  # [nb, NCLS] f32
        zmax = jnp.max(z, axis=-1, keepdims=True)
        lse = jnp.log(jnp.sum(jnp.exp(z - zmax), axis=-1, keepdims=True)) + zmax
        onehot = jax.lax.broadcasted_iota(jnp.int32, z.shape, 1) == tgt_ref[...]
        tz = jnp.sum(jnp.where(onehot, z, 0.0), axis=-1, keepdims=True)
        clf_nll_ref[...] = lse - tz                               # [nb, 1]

    tv = wlin_ref.shape[1]
    p = (jnp.dot(mv2, wlin_ref[...], preferred_element_type=jnp.float32)
         + blin_ref[...])                                        # [tr, tv] f32

    # online log-sum-exp update over the vocab axis
    m_new = jnp.maximum(m_sc[...], jnp.max(p, axis=-1, keepdims=True))
    l_sc[...] = (jnp.exp(m_sc[...] - m_new) * l_sc[...]
                 + jnp.sum(jnp.exp(p - m_new), axis=-1, keepdims=True))
    m_sc[...] = m_new

    # target logit (each token id falls in exactly one vocab tile)
    col = jax.lax.broadcasted_iota(jnp.int32, (tr, tv), 1) + j * tv
    t_sc[...] += jnp.sum(jnp.where(col == tok_ref[...], p, 0.0),
                         axis=-1, keepdims=True)

    @pl.when(j == nv - 1)
    def _():
        mask_nll_ref[...] = m_sc[...] + jnp.log(l_sc[...]) - t_sc[...]


def pere_head_train_losses(mask_vector, token_ids, targets,
                           w_fc, b_fc, w_lin, b_lin):
    B, L, d = mask_vector.shape
    BL = B * L
    V = w_lin.shape[1]
    tv = min(TV, V)
    assert d == D and V % tv == 0
    nv = V // tv
    # span-aligned row tile (leading "parallel" grid axis; 1 tile at toy size)
    tr = min(max((ROW_TILE_ROWS // L) * L, L), BL)
    assert BL % tr == 0 and tr % L == 0
    nr = BL // tr
    nb = tr // L

    mv2 = mask_vector.reshape(BL, d).astype(jnp.bfloat16)
    tok = token_ids.reshape(BL, 1).astype(jnp.int32)
    tgt = targets.reshape(B, 1).astype(jnp.int32)
    wfc = _as_bf16(w_fc)
    wlin = _as_bf16(w_lin)

    wlin_spec = pl.BlockSpec((d, tv), lambda i, j: (0, j))
    if nv >= 3:
        wlin_spec = pl.BlockSpec((d, tv), lambda i, j: (0, j),
                                 pipeline_mode=pl.Buffered(3))

    cost = pl.CostEstimate(
        flops=2 * BL * d * V + nr * (2 * nb * tr * d + 2 * nb * d * NCLS),
        transcendentals=BL * V + BL * nv + B * NCLS,
        bytes_accessed=(nr * (d * V * 2 + V * 4)     # w_lin/b_lin per row tile
                        + BL * d * 2 * nv            # mv re-read per vocab tile
                        + BL * 4 * (1 + nv)          # tok reads + nll out
                        + B * 4 * 2 + d * NCLS * 2))

    clf_nll, mask_nll = pl.pallas_call(
        functools.partial(head_train_kernel, span=L),
        grid=(nr, nv),
        in_specs=[
            pl.BlockSpec((tr, d),   lambda i, j: (i, 0)),
            pl.BlockSpec((tr, 1),   lambda i, j: (i, 0)),
            pl.BlockSpec((nb, 1),   lambda i, j: (i, 0)),
            pl.BlockSpec((d, NCLS), lambda i, j: (0, 0)),
            pl.BlockSpec((1, NCLS), lambda i, j: (0, 0)),
            wlin_spec,
            pl.BlockSpec((1, tv),   lambda i, j: (0, j)),
        ],
        out_specs=[
            pl.BlockSpec((nb, 1), lambda i, j: (i, 0)),
            pl.BlockSpec((tr, 1), lambda i, j: (i, 0)),
        ],
        out_shape=[
            jax.ShapeDtypeStruct((B, 1), jnp.float32),
            jax.ShapeDtypeStruct((BL, 1), jnp.float32),
        ],
        scratch_shapes=[pltpu.VMEM((tr, 1), jnp.float32)] * 3,
        cost_estimate=cost,
        # Row-tile axis "parallel" (v7x dual-core); vocab axis MUST stay
        # "arbitrary" (sequential online-LSE scratch carry).
        compiler_params=pltpu.CompilerParams(
            dimension_semantics=("parallel", "arbitrary")),
    )(mv2, tok, tgt, wfc, b_fc, wlin, b_lin)
    return clf_nll, mask_nll


# ---------------------------------------------------------------------------
# Glue: surrogate BART + span gather + full forward
# ---------------------------------------------------------------------------
def gather_spans(hidden, mask_positions, span_len):
    # decoder_contexts[i, start_i : end_i + 1, :]  (all spans have equal
    # length, required by torch.stack in the reference)
    def one(h, pos):
        return jax.lax.dynamic_slice_in_dim(h, pos[0], span_len, axis=0)
    return jax.vmap(one)(hidden, mask_positions)


def pere_forward(params, enc_input_ids, enc_mask_ids, dec_input_ids,
                 dec_mask_ids, mask_positions, targets, token_ids,
                 span_len, training=True):
    emb, w_fc, b_fc, w_lin, b_lin = params

    # TODO(synk): pretrained BartModel encoder/decoder (with cross-attention)
    # has no Pallas equivalent; replaced by a deterministic embedding surrogate
    # producing decoder hidden states of identical shape [B, S_dec, D].
    enc_hidden = emb[enc_input_ids] * enc_mask_ids[..., None]
    enc_ctx = jnp.mean(enc_hidden, axis=1, keepdims=True)
    decoder_contexts = (emb[dec_input_ids] + enc_ctx) * dec_mask_ids[..., None]

    mask_vector = gather_spans(decoder_contexts, mask_positions, span_len)

    if training:
        clf_nll, mask_nll = pere_head_train_losses(
            mask_vector, token_ids, targets, w_fc, b_fc, w_lin, b_lin)
        # mean-reduction + weighted combine of <= B*L scalars (trivial).
        return 0.7 * jnp.mean(clf_nll) + 0.3 * jnp.mean(mask_nll)

    logits, predictions = pere_head_eval(mask_vector, w_fc, b_fc, w_lin, b_lin)
    return logits, predictions


if __name__ == "__main__":
    B, S_ENC, S_DEC, L = 2, 16, 8, 4

    key = jax.random.PRNGKey(0)
    k_emb, k_wfc, k_bfc, k_wlin, k_blin, k_enc, k_dec, k_tok = \
        jax.random.split(key, 8)

    # deterministic parameters; matmul weights converted to bf16 ONCE here.
    emb   = (jax.random.normal(k_emb,  (VOCAB, D)) * 0.02).astype(jnp.float32)
    w_fc  = (jax.random.normal(k_wfc,  (D, NCLS))  * 0.02).astype(jnp.float32)
    b_fc  = (jax.random.normal(k_bfc,  (1, NCLS))  * 0.02).astype(jnp.float32)
    w_lin = (jax.random.normal(k_wlin, (D, VOCAB)) * 0.02).astype(jnp.float32)
    b_lin = (jax.random.normal(k_blin, (1, VOCAB)) * 0.02).astype(jnp.float32)
    params = prepare_params(emb, w_fc, b_fc, w_lin, b_lin)

    # deterministic example inputs
    enc_input_ids = jax.random.randint(k_enc, (B, S_ENC), 0, VOCAB, jnp.int32)
    dec_input_ids = jax.random.randint(k_dec, (B, S_DEC), 0, VOCAB, jnp.int32)
    enc_mask_ids  = jnp.ones((B, S_ENC), jnp.float32)
    dec_mask_ids  = jnp.ones((B, S_DEC), jnp.float32)
    mask_positions = jnp.array([[2, 5], [3, 6]], jnp.int32)   # inclusive spans, len L
    targets   = jnp.array([0, 2], jnp.int32)
    token_ids = jax.random.randint(k_tok, (B, L), 0, VOCAB, jnp.int32)

    total_loss = pere_forward(params, enc_input_ids, enc_mask_ids,
                              dec_input_ids, dec_mask_ids, mask_positions,
                              targets, token_ids, span_len=L, training=True)
    jax.block_until_ready(total_loss)

    logits, predictions = pere_forward(params, enc_input_ids, enc_mask_ids,
                                       dec_input_ids, dec_mask_ids,
                                       mask_positions, targets, token_ids,
                                       span_len=L, training=False)
    jax.block_until_ready((logits, predictions))

    assert logits.shape == (B, NCLS) and predictions.shape == (B, L, VOCAB)
    assert jnp.isfinite(total_loss)
    print("KERNEL_OK")
</pallas_src>

<mosaic_0001>
module attributes {stable_mosaic.version = 11 : i64} {
  func.func @head_train_kernel(%arg0: i32, %arg1: i32, %arg2: memref<8x256xbf16, #tpu.memory_space<vmem>>, %arg3: memref<8x1xi32, #tpu.memory_space<vmem>>, %arg4: memref<2x1xi32, #tpu.memory_space<vmem>>, %arg5: memref<256x3xbf16, #tpu.memory_space<vmem>>, %arg6: memref<1x3xf32, #tpu.memory_space<vmem>>, %arg7: memref<256x512xbf16, #tpu.memory_space<vmem>>, %arg8: memref<1x512xf32, #tpu.memory_space<vmem>>, %arg9: memref<2x1xf32, #tpu.memory_space<vmem>>, %arg10: memref<8x1xf32, #tpu.memory_space<vmem>>, %arg11: memref<8x1xf32, #tpu.memory_space<vmem>>, %arg12: memref<8x1xf32, #tpu.memory_space<vmem>>, %arg13: memref<8x1xf32, #tpu.memory_space<vmem>>) attributes {dimension_semantics = [#tpu.dimension_semantics<parallel>, #tpu.dimension_semantics<arbitrary>], iteration_bounds = array<i64: 1, 1>, scalar_prefetch = 0 : i64, scratch_operands = 3 : i64, tpu.core_type = #tpu.core_type<tc>, window_params = [{transform_indices = @transform_0, window_bounds = array<i64: 8, 256>}, {transform_indices = @transform_1, window_bounds = array<i64: 8, 1>}, {transform_indices = @transform_2, window_bounds = array<i64: 2, 1>}, {pipeline_mode = #tpu.pipeline_mode<synchronous>, transform_indices = @transform_3, window_bounds = array<i64: 256, 3>}, {pipeline_mode = #tpu.pipeline_mode<synchronous>, transform_indices = @transform_4, window_bounds = array<i64: 1, 3>}, {transform_indices = @transform_5, window_bounds = array<i64: 256, 512>}, {transform_indices = @transform_6, window_bounds = array<i64: 1, 512>}, {transform_indices = @transform_7, window_bounds = array<i64: 2, 1>}, {transform_indices = @transform_8, window_bounds = array<i64: 8, 1>}]} {
    %c0 = arith.constant 0 : index
    %c0_0 = arith.constant 0 : index
    %0 = vector.load %arg2[%c0, %c0_0] : memref<8x256xbf16, #tpu.memory_space<vmem>>, vector<8x256xbf16>
    %c0_i32 = arith.constant 0 : i32
    %1 = arith.cmpi eq, %arg1, %c0_i32 : i32
    %2 = arith.extui %1 : i1 to i32
    %c0_i32_1 = arith.constant 0 : i32
    %3 = arith.cmpi ne, %2, %c0_i32_1 : i32
    scf.if %3 {
      %cst_28 = arith.constant 0xFF800000 : f32
      %43 = vector.broadcast %cst_28 : f32 to vector<8x1xf32>
      %c0_29 = arith.constant 0 : index
      %c0_30 = arith.constant 0 : index
      %44 = vector.load %arg11[%c0_29, %c0_30] : memref<8x1xf32, #tpu.memory_space<vmem>>, vector<8x1xf32>
      tpu.vector_store %arg11[%c0_29, %c0_30], %43 {strides = array<i32>} : memref<8x1xf32, #tpu.memory_space<vmem>>, vector<8x1xf32>,
      %cst_31 = arith.constant 0.000000e+00 : f32
      %45 = vector.broadcast %cst_31 : f32 to vector<8x1xf32>
      %c0_32 = arith.constant 0 : index
      %c0_33 = arith.constant 0 : index
      %46 = vector.load %arg12[%c0_32, %c0_33] : memref<8x1xf32, #tpu.memory_space<vmem>>, vector<8x1xf32>
      tpu.vector_store %arg12[%c0_32, %c0_33], %45 {strides = array<i32>} : memref<8x1xf32, #tpu.memory_space<vmem>>, vector<8x1xf32>,
      %cst_34 = arith.constant 0.000000e+00 : f32
      %47 = vector.broadcast %cst_34 : f32 to vector<8x1xf32>
      %c0_35 = arith.constant 0 : index
      %c0_36 = arith.constant 0 : index
      %48 = vector.load %arg13[%c0_35, %c0_36] : memref<8x1xf32, #tpu.memory_space<vmem>>, vector<8x1xf32>
      tpu.vector_store %arg13[%c0_35, %c0_36], %47 {strides = array<i32>} : memref<8x1xf32, #tpu.memory_space<vmem>>, vector<8x1xf32>,
      %c0_37 = arith.constant 0 : index
      %c0_38 = arith.constant 0 : index
      %49 = vector.load %arg5[%c0_37, %c0_38] : memref<256x3xbf16, #tpu.memory_space<vmem>>, vector<256x3xbf16>
      %c0_39 = arith.constant 0 : index
      %c0_40 = arith.constant 0 : index
      %50 = vector.load %arg6[%c0_39, %c0_40] : memref<1x3xf32, #tpu.memory_space<vmem>>, vector<1x3xf32>
      %51 = tpu.iota {dimensions = array<i32: 0>} : vector<2x8xi32>
      %52 = tpu.iota {dimensions = array<i32: 1>} : vector<2x8xi32>
      %c4_i32 = arith.constant 4 : i32
      %53 = vector.broadcast %c4_i32 : i32 to vector<2x8xi32>
      %54 = arith.muli %51, %53 : vector<2x8xi32>
      %55 = arith.cmpi sge, %52, %54 : vector<2x8xi32>
      %c1_i32 = arith.constant 1 : i32
      %56 = vector.broadcast %c1_i32 : i32 to vector<2x8xi32>
      %57 = arith.addi %51, %56 : vector<2x8xi32>
      %c4_i32_41 = arith.constant 4 : i32
      %58 = vector.broadcast %c4_i32_41 : i32 to vector<2x8xi32>
      %59 = arith.muli %57, %58 : vector<2x8xi32>
      %60 = arith.cmpi slt, %52, %59 : vector<2x8xi32>
      %61 = arith.andi %55, %60 : vector<2x8xi1>
      %cst_42 = arith.constant 1.000000e+00 : f32
      %cst_43 = arith.constant 0.000000e+00 : f32
      %62 = vector.broadcast %cst_42 : f32 to vector<2x8xf32>
      %63 = vector.broadcast %cst_43 : f32 to vector<2x8xf32>
      %64 = arith.select %61, %62, %63 : vector<2x8xi1>, vector<2x8xf32>
      %65 = arith.truncf %64 : vector<2x8xf32> to vector<2x8xbf16>
      %cst_44 = arith.constant dense<0.000000e+00> : vector<2x256xf32>
      %66 = tpu.matmul %65, %0, %cst_44 {dimension_numbers = #tpu.dot_dimension_numbers<[1], [0], [0], [1], [0, 0, 1, 1], [], []>} : vector<2x8xbf16>, vector<8x256xbf16>, vector<2x256xf32> -> vector<2x256xf32>
      %cst_45 = arith.constant 2.500000e-01 : f32
      %67 = vector.broadcast %cst_45 : f32 to vector<2x256xf32>
      %68 = arith.mulf %66, %67 : vector<2x256xf32>
      %69 = arith.truncf %68 : vector<2x256xf32> to vector<2x256xbf16>
      %cst_46 = arith.constant dense<0.000000e+00> : vector<2x3xf32>
      %70 = tpu.matmul %69, %49, %cst_46 {dimension_numbers = #tpu.dot_dimension_numbers<[1], [0], [0], [1], [0, 0, 1, 1], [], []>} : vector<2x256xbf16>, vector<256x3xbf16>, vector<2x3xf32> -> vector<2x3xf32>
      %71 = vector.broadcast %50 : vector<1x3xf32> to vector<2x3xf32>
      %72 = arith.addf %70, %71 : vector<2x3xf32>
      %cst_47 = arith.constant 0.000000e+00 : f32
      %73 = vector.broadcast %cst_47 : f32 to vector<2x3xf32>
      %74 = arith.cmpf oge, %72, %73 : vector<2x3xf32>
      %cst_48 = arith.constant 2.000000e-01 : f32
      %75 = vector.broadcast %cst_48 : f32 to vector<2x3xf32>
      %76 = arith.mulf %75, %72 : vector<2x3xf32>
      %77 = arith.select %74, %72, %76 : vector<2x3xi1>, vector<2x3xf32>
      %cst_49 = arith.constant dense<0xFF800000> : vector<2xf32>
      %78 = vector.multi_reduction <maximumf>, %77, %cst_49 [1] : vector<2x3xf32> to vector<2xf32>
      %79 = vector.shape_cast %78 : vector<2xf32> to vector<2x1xf32>
      %80 = vector.broadcast %79 : vector<2x1xf32> to vector<2x3xf32>
      %81 = arith.subf %77, %80 : vector<2x3xf32>
      %82 = math.exp %81 : vector<2x3xf32>
      %cst_50 = arith.constant dense<0.000000e+00> : vector<2xf32>
      %83 = vector.multi_reduction <add>, %82, %cst_50 [1] : vector<2x3xf32> to vector<2xf32>
      %84 = vector.shape_cast %83 : vector<2xf32> to vector<2x1xf32>
      %85 = math.log %84 : vector<2x1xf32>
      %86 = arith.addf %85, %79 : vector<2x1xf32>
      %87 = tpu.iota {dimensions = array<i32: 1>} : vector<2x3xi32>
      %c0_51 = arith.constant 0 : index
      %c0_52 = arith.constant 0 : index
      %88 = vector.load %arg4[%c0_51, %c0_52] : memref<2x1xi32, #tpu.memory_space<vmem>>, vector<2x1xi32>
      %89 = vector.broadcast %88 : vector<2x1xi32> to vector<2x3xi32>
      %90 = arith.cmpi eq, %87, %89 : vector<2x3xi32>
      %cst_53 = arith.constant 0.000000e+00 : f32
      %91 = vector.broadcast %cst_53 : f32 to vector<2x3xf32>
      %92 = arith.select %90, %77, %91 : vector<2x3xi1>, vector<2x3xf32>
      %cst_54 = arith.constant dense<0.000000e+00> : vector<2xf32>
      %93 = vector.multi_reduction <add>, %92, %cst_54 [1] : vector<2x3xf32> to vector<2xf32>
      %94 = vector.shape_cast %93 : vector<2xf32> to vector<2x1xf32>
      %95 = arith.subf %86, %94 : vector<2x1xf32>
      %c0_55 = arith.constant 0 : index
      %c0_56 = arith.constant 0 : index
      %96 = vector.load %arg9[%c0_55, %c0_56] : memref<2x1xf32, #tpu.memory_space<vmem>>, vector<2x1xf32>
      tpu.vector_store %arg9[%c0_55, %c0_56], %95 {strides = array<i32>} : memref<2x1xf32, #tpu.memory_space<vmem>>, vector<2x1xf32>,
    } else {
    }
    %c0_2 = arith.constant 0 : index
    %c0_3 = arith.constant 0 : index
    %4 = vector.load %arg7[%c0_2, %c0_3] : memref<256x512xbf16, #tpu.memory_space<vmem>>, vector<256x512xbf16>
    %cst = arith.constant dense<0.000000e+00> : vector<8x512xf32>
    %5 = tpu.matmul %0, %4, %cst {dimension_numbers = #tpu.dot_dimension_numbers<[1], [0], [0], [1], [0, 0, 1, 1], [], []>} : vector<8x256xbf16>, vector<256x512xbf16>, vector<8x512xf32> -> vector<8x512xf32>
    %c0_4 = arith.constant 0 : index
    %c0_5 = arith.constant 0 : index
    %6 = vector.load %arg8[%c0_4, %c0_5] : memref<1x512xf32, #tpu.memory_space<vmem>>, vector<1x512xf32>
    %7 = vector.broadcast %6 : vector<1x512xf32> to vector<8x512xf32>
    %8 = arith.addf %5, %7 : vector<8x512xf32>
    %c0_6 = arith.constant 0 : index
    %c0_7 = arith.constant 0 : index
    %9 = vector.load %arg11[%c0_6, %c0_7] : memref<8x1xf32, #tpu.memory_space<vmem>>, vector<8x1xf32>
    %cst_8 = arith.constant dense<0xFF800000> : vector<8xf32>
    %10 = vector.multi_reduction <maximumf>, %8, %cst_8 [1] : vector<8x512xf32> to vector<8xf32>
    %11 = vector.shape_cast %10 : vector<8xf32> to vector<8x1xf32>
    %12 = arith.maximumf %9, %11 : vector<8x1xf32>
    %c0_9 = arith.constant 0 : index
    %c0_10 = arith.constant 0 : index
    %13 = vector.load %arg11[%c0_9, %c0_10] : memref<8x1xf32, #tpu.memory_space<vmem>>, vector<8x1xf32>
    %14 = arith.subf %13, %12 : vector<8x1xf32>
    %15 = math.exp %14 : vector<8x1xf32>
    %c0_11 = arith.constant 0 : index
    %c0_12 = arith.constant 0 : index
    %16 = vector.load %arg12[%c0_11, %c0_12] : memref<8x1xf32, #tpu.memory_space<vmem>>, vector<8x1xf32>
    %17 = arith.mulf %15, %16 : vector<8x1xf32>
    %18 = vector.broadcast %12 : vector<8x1xf32> to vector<8x512xf32>
    %19 = arith.subf %8, %18 : vector<8x512xf32>
    %20 = math.exp %19 : vector<8x512xf32>
    %cst_13 = arith.constant dense<0.000000e+00> : vector<8xf32>
    %21 = vector.multi_reduction <add>, %20, %cst_13 [1] : vector<8x512xf32> to vector<8xf32>
    %22 = vector.shape_cast %21 : vector<8xf32> to vector<8x1xf32>
    %23 = arith.addf %17, %22 : vector<8x1xf32>
    %c0_14 = arith.constant 0 : index
    %c0_15 = arith.constant 0 : index
    %24 = vector.load %arg12[%c0_14, %c0_15] : memref<8x1xf32, #tpu.memory_space<vmem>>, vector<8x1xf32>
    tpu.vector_store %arg12[%c0_14, %c0_15], %23 {strides = array<i32>} : memref<8x1xf32, #tpu.memory_space<vmem>>, vector<8x1xf32>,
    %c0_16 = arith.constant 0 : index
    %c0_17 = arith.constant 0 : index
    %25 = vector.load %arg11[%c0_16, %c0_17] : memref<8x1xf32, #tpu.memory_space<vmem>>, vector<8x1xf32>
    tpu.vector_store %arg11[%c0_16, %c0_17], %12 {strides = array<i32>} : memref<8x1xf32, #tpu.memory_space<vmem>>, vector<8x1xf32>,
    %26 = tpu.iota {dimensions = array<i32: 1>} : vector<8x512xi32>
    %c512_i32 = arith.constant 512 : i32
    %27 = arith.muli %arg1, %c512_i32 : i32
    %28 = vector.broadcast %27 : i32 to vector<8x512xi32>
    %29 = arith.addi %26, %28 : vector<8x512xi32>
    %c0_18 = arith.constant 0 : index
    %c0_19 = arith.constant 0 : index
    %30 = vector.load %arg13[%c0_18, %c0_19] : memref<8x1xf32, #tpu.memory_space<vmem>>, vector<8x1xf32>
    %c0_20 = arith.constant 0 : index
    %c0_21 = arith.constant 0 : index
    %31 = vector.load %arg3[%c0_20, %c0_21] : memref<8x1xi32, #tpu.memory_space<vmem>>, vector<8x1xi32>
    %32 = vector.broadcast %31 : vector<8x1xi32> to vector<8x512xi32>
    %33 = arith.cmpi eq, %29, %32 : vector<8x512xi32>
    %cst_22 = arith.constant 0.000000e+00 : f32
    %34 = vector.broadcast %cst_22 : f32 to vector<8x512xf32>
    %35 = arith.select %33, %8, %34 : vector<8x512xi1>, vector<8x512xf32>
    %cst_23 = arith.constant dense<0.000000e+00> : vector<8xf32>
    %36 = vector.multi_reduction <add>, %35, %cst_23 [1] : vector<8x512xf32> to vector<8xf32>
    %37 = vector.shape_cast %36 : vector<8xf32> to vector<8x1xf32>
    %38 = arith.addf %30, %37 : vector<8x1xf32>
    %c0_24 = arith.constant 0 : index
    %c0_25 = arith.constant 0 : index
    %39 = vector.load %arg13[%c0_24, %c0_25] : memref<8x1xf32, #tpu.memory_space<vmem>>, vector<8x1xf32>
    tpu.vector_store %arg13[%c0_24, %c0_25], %38 {strides = array<i32>} : memref<8x1xf32, #tpu.memory_space<vmem>>, vector<8x1xf32>,
    %c0_i32_26 = arith.constant 0 : i32
    %40 = arith.cmpi eq, %arg1, %c0_i32_26 : i32
    %41 = arith.extui %40 : i1 to i32
    %c0_i32_27 = arith.constant 0 : i32
    %42 = arith.cmpi ne, %41, %c0_i32_27 : i32
    scf.if %42 {
      %c0_28 = arith.constant 0 : index
      %c0_29 = arith.constant 0 : index
      %43 = vector.load %arg11[%c0_28, %c0_29] : memref<8x1xf32, #tpu.memory_space<vmem>>, vector<8x1xf32>
      %c0_30 = arith.constant 0 : index
      %c0_31 = arith.constant 0 : index
      %44 = vector.load %arg12[%c0_30, %c0_31] : memref<8x1xf32, #tpu.memory_space<vmem>>, vector<8x1xf32>
      %45 = math.log %44 : vector<8x1xf32>
      %46 = arith.addf %43, %45 : vector<8x1xf32>
      %c0_32 = arith.constant 0 : index
      %c0_33 = arith.constant 0 : index
      %47 = vector.load %arg13[%c0_32, %c0_33] : memref<8x1xf32, #tpu.memory_space<vmem>>, vector<8x1xf32>
      %48 = arith.subf %46, %47 : vector<8x1xf32>
      %c0_34 = arith.constant 0 : index
      %c0_35 = arith.constant 0 : index
      %49 = vector.load %arg10[%c0_34, %c0_35] : memref<8x1xf32, #tpu.memory_space<vmem>>, vector<8x1xf32>
      tpu.vector_store %arg10[%c0_34, %c0_35], %48 {strides = array<i32>} : memref<8x1xf32, #tpu.memory_space<vmem>>, vector<8x1xf32>,
    } else {
    }
    return
  }
  func.func @transform_0(%arg0: i32, %arg1: i32) -> (i32, i32) {
    %c0_i32 = arith.constant 0 : i32
    %c0_i32_0 = arith.constant 0 : i32
    return %arg0, %c0_i32 : i32, i32
  }
  func.func @transform_1(%arg0: i32, %arg1: i32) -> (i32, i32) {
    %c0_i32 = arith.constant 0 : i32
    %c0_i32_0 = arith.constant 0 : i32
    return %arg0, %c0_i32 : i32, i32
  }
  func.func @transform_2(%arg0: i32, %arg1: i32) -> (i32, i32) {
    %c0_i32 = arith.constant 0 : i32
    %c0_i32_0 = arith.constant 0 : i32
    return %arg0, %c0_i32 : i32, i32
  }
  func.func @transform_3(%arg0: i32, %arg1: i32) -> (i32, i32) {
    %c0_i32 = arith.constant 0 : i32
    %c0_i32_0 = arith.constant 0 : i32
    %c0_i32_1 = arith.constant 0 : i32
    return %c0_i32, %c0_i32_0 : i32, i32
  }
  func.func @transform_4(%arg0: i32, %arg1: i32) -> (i32, i32) {
    %c0_i32 = arith.constant 0 : i32
    %c0_i32_0 = arith.constant 0 : i32
    %c0_i32_1 = arith.constant 0 : i32
    return %c0_i32, %c0_i32_0 : i32, i32
  }
  func.func @transform_5(%arg0: i32, %arg1: i32) -> (i32, i32) {
    %c0_i32 = arith.constant 0 : i32
    %c0_i32_0 = arith.constant 0 : i32
    return %c0_i32, %arg1 : i32, i32
  }
  func.func @transform_6(%arg0: i32, %arg1: i32) -> (i32, i32) {
    %c0_i32 = arith.constant 0 : i32
    %c0_i32_0 = arith.constant 0 : i32
    return %c0_i32, %arg1 : i32, i32
  }
  func.func @transform_7(%arg0: i32, %arg1: i32) -> (i32, i32) {
    %c0_i32 = arith.constant 0 : i32
    %c0_i32_0 = arith.constant 0 : i32
    return %arg0, %c0_i32 : i32, i32
  }
  func.func @transform_8(%arg0: i32, %arg1: i32) -> (i32, i32) {
    %c0_i32 = arith.constant 0 : i32
    %c0_i32_0 = arith.constant 0 : i32
    return %arg0, %c0_i32 : i32, i32
  }
}

</mosaic_0001>

<llo_original>
// kernel: tpu_custom_call.1
$region0: #{tpu_custom_call.1}
  #allocation0 [shape = 'u32[]', space=smem, size = 0x4, offset = 0x4, fixed_abs, tag = 'smem constant byte address 0x4 - core index']
  #allocation1 [shape = 'u32[72,128]{1,0:T(1,128)}', space=vmem, size = 0x9000, scoped, tag = 'internal scratch']
  #allocation2 [shape = 'f32[8,1]{1,0:T(8,128)}', space=vmem, size = 0x1000, scoped, tag = 'scratch operand']
  #allocation3 [shape = 'f32[8,1]{1,0:T(8,128)}', space=vmem, size = 0x1000, scoped, tag = 'scratch operand']
  #allocation4 [shape = 'f32[8,1]{1,0:T(8,128)}', space=vmem, size = 0x1000, scoped, tag = 'scratch operand']
  %s0 = inlined_call_operand.vmem [shape: bf16[8,256], index: 0, kind: input, shape index: {}]
  %s1 = inlined_call_operand.vmem [shape: s32[8,1], index: 1, kind: input, shape index: {}]
  %s2 = inlined_call_operand.vmem [shape: s32[2,1], index: 2, kind: input, shape index: {}]
  %s3 = inlined_call_operand.vmem [shape: bf16[256,3], index: 3, kind: input, shape index: {}]
  %s4 = inlined_call_operand.vmem [shape: f32[1,3], index: 4, kind: input, shape index: {}]
  %s5 = inlined_call_operand.hbm [shape: bf16[256,512], index: 5, kind: input, shape index: {}]
  %s6 = inlined_call_operand.vmem [shape: f32[1,512], index: 6, kind: input, shape index: {}]
  %s7 = inlined_call_operand.vmem [shape: f32[2,1], index: 7, kind: output, shape index: {0}]
  %s8 = inlined_call_operand.vmem [shape: f32[8,1], index: 8, kind: output, shape index: {1}]
  %9 = xla_tuple %s7, %s8
  %s10 = sld [smem:[#allocation0]]
  $region58: #{tpu_custom_call.1} parent=0
    _
  %s12 = ssub.s32 1, %s10
  %s13 = scalar_select 0, %s12, %s10
  $region1: #{tpu_custom_call.1} parent=0
    #allocation5 [shape = 'u8[262144]{0}', space=vmem, size = 0x40000, scoped, tag = 'input window, operand 5, single buffered']
    #allocation6 [shape = 's32[1]{0}', space=sflag, size = 0x4, scoped, tag = 'scoped memory for tpu_custom_call.1']
    %14 = vsyncpa [#allocation6], 0
    // Predicated region
    $region2: #{tpu_custom_call.1} parent=1 // pred_check
      _
    $region3: #{tpu_custom_call.1} parent=1 // pred_check_branch
      %16 = sbr.rel (0) target = $region5
    $region4: #{tpu_custom_call.1} parent=1 // pred_region
      _
    $region5: #{tpu_custom_call.1} parent=1 // pred_fallthru
      _
    // Predicated region
    $region6: #{tpu_custom_call.1} parent=1 // pred_check
      _
    $region7: #{tpu_custom_call.1} parent=1 // pred_check_branch
      %18 = sbr.rel (0) target = $region9
    $region8: #{tpu_custom_call.1} parent=1 // pred_region
      _
    $region9: #{tpu_custom_call.1} parent=1 // pred_fallthru
      _
    // Predicated region
    $region10: #{tpu_custom_call.1} parent=1 // pred_check
      _
    $region11: #{tpu_custom_call.1} parent=1 // pred_check_branch
      %20 = sbr.rel (0) target = $region13
    $region12: #{tpu_custom_call.1} parent=1 // pred_region
      _
    $region13: #{tpu_custom_call.1} parent=1 // pred_fallthru
      _
    // Predicated region
    $region14: #{tpu_custom_call.1} parent=1 // pred_check
      _
    $region15: #{tpu_custom_call.1} parent=1 // pred_check_branch
      %22 = sbr.rel (0) target = $region17
    $region16: #{tpu_custom_call.1} parent=1 // pred_region
      _
    $region17: #{tpu_custom_call.1} parent=1 // pred_fallthru
      _
    // Predicated region
    $region18: #{tpu_custom_call.1} parent=1 // pred_check
      _
    $region19: #{tpu_custom_call.1} parent=1 // pred_check_branch
      %24 = sbr.rel (0) target = $region21
    $region20: #{tpu_custom_call.1} parent=1 // pred_region
      _
    $region21: #{tpu_custom_call.1} parent=1 // pred_fallthru
      _
    // Predicated region
    $region22: #{tpu_custom_call.1} parent=1 // pred_check
      _
    $region23: #{tpu_custom_call.1} parent=1 // pred_check_branch
      %26 = sbr.rel (0) target = $region25
    $region24: #{tpu_custom_call.1} parent=1 // pred_region
      %28 = vsyncadd [#allocation6], 0
      %s29 = sshll.u32 %s5, 4
      %s30 = int_to_ptr.hbm [resolvable:$true] %s29
      %s31 = sshll.u32 [#allocation5], 4
      %s32 = int_to_ptr.vmem [resolvable:$true] %s31
      %37 = dma.hbm_to_vmem [thread:$0]  %s30, 8192, %s32, [#allocation6], 256, 256, 16
    $region25: #{tpu_custom_call.1} parent=1 // pred_fallthru
      _
    // Predicated region
    $region26: #{tpu_custom_call.1} parent=1 // pred_check
      _
    $region27: #{tpu_custom_call.1} parent=1 // pred_check_branch
      %39 = sbr.rel (0) target = $region29
    $region28: #{tpu_custom_call.1} parent=1 // pred_region
      _
    $region29: #{tpu_custom_call.1} parent=1 // pred_fallthru
      _
    // Predicated region
    $region30: #{tpu_custom_call.1} parent=1 // pred_check
      _
    $region31: #{tpu_custom_call.1} parent=1 // pred_check_branch
      %41 = sbr.rel (0) target = $region33
    $region32: #{tpu_custom_call.1} parent=1 // pred_region
      %43 = dma.done [#allocation6], 8192
    $region33: #{tpu_custom_call.1} parent=1 // pred_fallthru
      _
    %v45 = vld [vmem:[%s0] sm:$0xff]
    %p46 = scmp.eq.s32.totalorder 0, 0
    // Predicated region
    $region34: #{tpu_custom_call.1} parent=1 // pred_check
      %p47 = pneg %p46
    $region35: #{tpu_custom_call.1} parent=1 // pred_check_branch
      %49 = sbr.rel (%p47) target = $region37
    $region36: #{tpu_custom_call.1} parent=1 // pred_region
      %vm50 = vcmask 7168
      %51 = vst.msk [vmem:[#allocation2] sm:$0xff] %vm50, -inf
      %52 = vst.msk [vmem:[#allocation3] sm:$0xff] %vm50, 0.0
      %53 = vst.msk [vmem:[#allocation4] sm:$0xff] %vm50, 0.0
      %v54 = vld [vmem:[%s3] sm:$0xf]
      %v55 = vld [vmem:[%s3 + $0x4] sm:$0xf]
      %v56 = vld [vmem:[%s3 + $0x8] sm:$0xf]
      %v57 = vld [vmem:[%s3 + $0xc] sm:$0xf]
      %v58 = vld [vmem:[%s3 + $0x10] sm:$0xf]
      %v59 = vld [vmem:[%s3 + $0x14] sm:$0xf]
      %v60 = vld [vmem:[%s3 + $0x18] sm:$0xf]
      %v61 = vld [vmem:[%s3 + $0x1c] sm:$0xf]
      %v62 = vld [vmem:[%s3 + $0x20] sm:$0xf]
      %v63 = vld [vmem:[%s3 + $0x24] sm:$0xf]
      %v64 = vld [vmem:[%s3 + $0x28] sm:$0xf]
      %v65 = vld [vmem:[%s3 + $0x2c] sm:$0xf]
      %v66 = vld [vmem:[%s3 + $0x30] sm:$0xf]
      %v67 = vld [vmem:[%s3 + $0x34] sm:$0xf]
      %v68 = vld [vmem:[%s3 + $0x38] sm:$0xf]
      %v69 = vld [vmem:[%s3 + $0x3c] sm:$0xf]
      %v70 = vld [vmem:[%s3 + $0x40] sm:$0xf]
      %v71 = vld [vmem:[%s3 + $0x44] sm:$0xf]
      %v72 = vld [vmem:[%s3 + $0x48] sm:$0xf]
      %v73 = vld [vmem:[%s3 + $0x4c] sm:$0xf]
      %v74 = vld [vmem:[%s3 + $0x50] sm:$0xf]
      %v75 = vld [vmem:[%s3 + $0x54] sm:$0xf]
      %v76 = vld [vmem:[%s3 + $0x58] sm:$0xf]
      %v77 = vld [vmem:[%s3 + $0x5c] sm:$0xf]
      %v78 = vld [vmem:[%s3 + $0x60] sm:$0xf]
      %v79 = vld [vmem:[%s3 + $0x64] sm:$0xf]
      %v80 = vld [vmem:[%s3 + $0x68] sm:$0xf]
      %v81 = vld [vmem:[%s3 + $0x6c] sm:$0xf]
      %v82 = vld [vmem:[%s3 + $0x70] sm:$0xf]
      %v83 = vld [vmem:[%s3 + $0x74] sm:$0xf]
      %v84 = vld [vmem:[%s3 + $0x78] sm:$0xf]
      %v85 = vld [vmem:[%s3 + $0x7c] sm:$0xf]
      %v86 = vld [vmem:[%s4] sm:$0x1]
      %v87 = vlaneseq
      %v88 = vshrl.u32 %v87, 7
      %v89 = vlaneseq
      %v90 = vand.u32 %v89, 127
      %v91 = vmul.u32 %v88, 4
      %vm92 = vcmp.ge.s32.totalorder %v90, %v91
      %v93 = vadd.s32 %v88, 1
      %v94 = vmul.u32 %v93, 4
      %vm95 = vcmp.lt.s32.totalorder %v90, %v94
      %vm96 = vmand %vm92, %vm95
      %v97 = vsel %vm96, 1.0, 0.0
      %v98 = vpack.c.bf16 %v97, %v97
      %v100 = vunpack.c.l.b16 %v45
      %v101 = vunpack.c.h.b16 %v45
      %v102 = vpack.c.b16 %v100, %v100
      %v103 = vpack.c.b16 %v101, %v101
      %vm104 = vcmask 64512
      %v106 = vsel %vm104, %v98, 0
      %vm108 = vcmask 1043456
      %v110 = vsel %vm108, %v102, 0
      %v113 = vsel %vm108, %v103, 0
      %115 = vmatpush.bf16.msra.mxu0 0
      %116 = vmatpush.bf16.msra.mxu0 0
      %117 = vmatpush.bf16.msra.mxu0 0
      %118 = vmatpush.bf16.msra.mxu0 0
      %119 = vmatpush.bf16.msra.mxu0 0
      %120 = vmatpush.bf16.msra.mxu0 0
      %121 = vmatpush.bf16.msra.mxu0 0
      %122 = vmatpush.bf16.msra.mxu0 %v110
      %123 = vmatmul.bf16.gmra.mxu0 %v106
      %v124 = vpop.f32.mrf.mxu0
      %v125 = vadd.f32 0.0, %v124
      %v126 = vpop.f32.mrf.mxu0
      %127 = vdwg.mxu0
      %128 = vmatpush.bf16.msra.mxu0 0
      %129 = vmatpush.bf16.msra.mxu0 0
      %130 = vmatpush.bf16.msra.mxu0 0
      %131 = vmatpush.bf16.msra.mxu0 0
      %132 = vmatpush.bf16.msra.mxu0 0
      %133 = vmatpush.bf16.msra.mxu0 0
      %134 = vmatpush.bf16.msra.mxu0 0
      %135 = vmatpush.bf16.msra.mxu0 %v113
      %136 = vmatmul.bf16.gmra.mxu0 %v106
      %v137 = vpop.f32.mrf.mxu0
      %v138 = vadd.f32 0.0, %v137
      %v139 = vpop.f32.mrf.mxu0
      %140 = vdwg.mxu0
      %v141 = vmul.f32 %v125, 0.25
      %v142 = vmul.f32 %v138, 0.25
      %v143 = vpack.c.bf16 %v141, %v141
      %v144 = vpack.c.bf16 %v142, %v142
      %v146 = vperm.slane %v86, 0
      %v180 = vunpack.c.l.b16 %v54
      %v181 = vunpack.c.l.b16 %v55
      %v182 = vunpack.c.l.b16 %v56
      %v183 = vunpack.c.l.b16 %v57
      %v184 = vunpack.c.l.b16 %v58
      %v185 = vunpack.c.l.b16 %v59
      %v186 = vunpack.c.l.b16 %v60
      %v187 = vunpack.c.l.b16 %v61
      %v188 = vunpack.c.l.b16 %v62
      %v189 = vunpack.c.l.b16 %v63
      %v190 = vunpack.c.l.b16 %v64
      %v191 = vunpack.c.l.b16 %v65
      %v192 = vunpack.c.l.b16 %v66
      %v193 = vunpack.c.l.b16 %v67
      %v194 = vunpack.c.l.b16 %v68
      %v195 = vunpack.c.l.b16 %v69
      %v196 = vunpack.c.l.b16 %v70
      %v197 = vunpack.c.l.b16 %v71
      %v198 = vunpack.c.l.b16 %v72
      %v199 = vunpack.c.l.b16 %v73
      %v200 = vunpack.c.l.b16 %v74
      %v201 = vunpack.c.l.b16 %v75
      %v202 = vunpack.c.l.b16 %v76
      %v203 = vunpack.c.l.b16 %v77
      %v204 = vunpack.c.l.b16 %v78
      %v205 = vunpack.c.l.b16 %v79
      %v206 = vunpack.c.l.b16 %v80
      %v207 = vunpack.c.l.b16 %v81
      %v208 = vunpack.c.l.b16 %v82
      %v209 = vunpack.c.l.b16 %v83
      %v210 = vunpack.c.l.b16 %v84
      %v211 = vunpack.c.l.b16 %v85
      %v212 = vpack.c.b16 %v181, %v180
      %v213 = vpack.c.b16 %v183, %v182
      %v214 = vpack.c.b16 %v185, %v184
      %v215 = vpack.c.b16 %v187, %v186
      %v216 = vpack.c.b16 %v189, %v188
      %v217 = vpack.c.b16 %v191, %v190
      %v218 = vpack.c.b16 %v193, %v192
      %v219 = vpack.c.b16 %v195, %v194
      %v220 = vpack.c.b16 %v197, %v196
      %v221 = vpack.c.b16 %v199, %v198
      %v222 = vpack.c.b16 %v201, %v200
      %v223 = vpack.c.b16 %v203, %v202
      %v224 = vpack.c.b16 %v205, %v204
      %v225 = vpack.c.b16 %v207, %v206
      %v226 = vpack.c.b16 %v209, %v208
      %v227 = vpack.c.b16 %v211, %v210
      %244 = vmatpush.bf16.msra.mxu0 %v219
      %245 = vmatpush.bf16.msra.mxu0 %v218
      %246 = vmatpush.bf16.msra.mxu0 %v217
      %247 = vmatpush.bf16.msra.mxu0 %v216
      %248 = vmatpush.bf16.msra.mxu0 %v215
      %249 = vmatpush.bf16.msra.mxu0 %v214
      %250 = vmatpush.bf16.msra.mxu0 %v213
      %251 = vmatpush.bf16.msra.mxu0 %v212
      %252 = vmatmul.bf16.gmra.mxu0 %v143
      %v253 = vpop.f32.mrf.mxu0
      %v254 = vadd.f32 %v146, %v253
      %v255 = vpop.f32.mrf.mxu0
      %256 = vdwg.mxu0
      %257 = vmatpush.bf16.msra.mxu0 %v227
      %258 = vmatpush.bf16.msra.mxu0 %v226
      %259 = vmatpush.bf16.msra.mxu0 %v225
      %260 = vmatpush.bf16.msra.mxu0 %v224
      %261 = vmatpush.bf16.msra.mxu0 %v223
      %262 = vmatpush.bf16.msra.mxu0 %v222
      %263 = vmatpush.bf16.msra.mxu0 %v221
      %264 = vmatpush.bf16.msra.mxu0 %v220
      %265 = vmatmul.bf16.gmra.mxu0 %v144
      %v266 = vpop.f32.mrf.mxu0
      %v267 = vadd.f32 %v254, %v266
      %v268 = vpop.f32.mrf.mxu0
      %269 = vdwg.mxu0
      %vm270 = vcmp.ge.f32.partialorder %v267, 0.0
      %v271 = vmul.f32 %v267, 0.2
      %v272 = vsel %vm270, %v267, %v271
      %vm273 = vcmask 17408
      %v274 = vsel %vm273, %v272, -inf
      %275 = vmax.xlane.f32.xlu0 %v274
      %v276 = vpop.xlane.xlu0 %275
      %v277 = vsub.f32 %v272, %v276
      %v278 = vmul.f32 %v277, 1.442695
      %v279 = vpow.pop %v278
      %v280 = vsel %vm273, %v279, 0.0
      %281 = vadd.xlane.f32.xlu0 %v280
      %v282 = vpop.xlane.xlu0 %281
      %v283 = vlog2.pop %v282
      %v284 = vmul.f32 %v283, 0.6931472
      %v285 = vadd.f32 %v284, %v276
      %v286 = vld [vmem:[%s2] sm:$0x3]
      %287 = vset.pattern.permute.xlu0 0
      %288 = vperm.xlu0 %287, %v286
      %v289 = vpop.permute.xlu0 %288
      %vm290 = vcmp.eq.s32.totalorder %v90, %v289
      %v291 = vsel %vm290, %v272, 0.0
      %v292 = vsel %vm273, %v291, 0.0
      %293 = vadd.xlane.f32.xlu0 %v292
      %v294 = vpop.xlane.xlu0 %293
      %v295 = vsub.f32 %v285, %v294
      %vm296 = vcmask 1024
      %297 = vst.msk [vmem:[%s7] sm:$0x3] %vm296, %v295
    $region37: #{tpu_custom_call.1} parent=1 // pred_fallthru
      _
    %v298 = vld [vmem:[#allocation5] sm:$0xff]
    %v299 = vld [vmem:[#allocation5 + $0x8] sm:$0xff]
    %v300 = vld [vmem:[#allocation5 + $0x10] sm:$0xff]
    %v301 = vld [vmem:[#allocation5 + $0x18] sm:$0xff]
    %v302 = vld [vmem:[#allocation5 + $0x20] sm:$0xff]
    %v303 = vld [vmem:[#allocation5 + $0x28] sm:$0xff]
    %v304 = vld [vmem:[#allocation5 + $0x30] sm:$0xff]
    %v305 = vld [vmem:[#allocation5 + $0x38] sm:$0xff]
    %v306 = vld [vmem:[#allocation5 + $0x40] sm:$0xff]
    %v307 = vld [vmem:[#allocation5 + $0x48] sm:$0xff]
    %v308 = vld [vmem:[#allocation5 + $0x50] sm:$0xff]
    %v309 = vld [vmem:[#allocation5 + $0x58] sm:$0xff]
    %v310 = vld [vmem:[#allocation5 + $0x60] sm:$0xff]
    %v311 = vld [vmem:[#allocation5 + $0x68] sm:$0xff]
    %v312 = vld [vmem:[#allocation5 + $0x70] sm:$0xff]
    %v313 = vld [vmem:[#allocation5 + $0x78] sm:$0xff]
    %v314 = vld [vmem:[#allocation5 + $0x80] sm:$0xff]
    %v315 = vld [vmem:[#allocation5 + $0x88] sm:$0xff]
    %v316 = vld [vmem:[#allocation5 + $0x90] sm:$0xff]
    %v317 = vld [vmem:[#allocation5 + $0x98] sm:$0xff]
    %v318 = vld [vmem:[#allocation5 + $0xa0] sm:$0xff]
    %v319 = vld [vmem:[#allocation5 + $0xa8] sm:$0xff]
    %v320 = vld [vmem:[#allocation5 + $0xb0] sm:$0xff]
    %v321 = vld [vmem:[#allocation5 + $0xb8] sm:$0xff]
    %v322 = vld [vmem:[#allocation5 + $0xc0] sm:$0xff]
    %v323 = vld [vmem:[#allocation5 + $0xc8] sm:$0xff]
    %v324 = vld [vmem:[#allocation5 + $0xd0] sm:$0xff]
    %v325 = vld [vmem:[#allocation5 + $0xd8] sm:$0xff]
    %v326 = vld [vmem:[#allocation5 + $0xe0] sm:$0xff]
    %v327 = vld [vmem:[#allocation5 + $0xe8] sm:$0xff]
    %v328 = vld [vmem:[#allocation5 + $0xf0] sm:$0xff]
    %v329 = vld [vmem:[#allocation5 + $0xf8] sm:$0xff]
    %v330 = vld [vmem:[#allocation5 + $0x100] sm:$0xff]
    %v331 = vld [vmem:[#allocation5 + $0x108] sm:$0xff]
    %v332 = vld [vmem:[#allocation5 + $0x110] sm:$0xff]
    %v333 = vld [vmem:[#allocation5 + $0x118] sm:$0xff]
    %v334 = vld [vmem:[#allocation5 + $0x120] sm:$0xff]
    %v335 = vld [vmem:[#allocation5 + $0x128] sm:$0xff]
    %v336 = vld [vmem:[#allocation5 + $0x130] sm:$0xff]
    %v337 = vld [vmem:[#allocation5 + $0x138] sm:$0xff]
    %v338 = vld [vmem:[#allocation5 + $0x140] sm:$0xff]
    %v339 = vld [vmem:[#allocation5 + $0x148] sm:$0xff]
    %v340 = vld [vmem:[#allocation5 + $0x150] sm:$0xff]
    %v341 = vld [vmem:[#allocation5 + $0x158] sm:$0xff]
    %v342 = vld [vmem:[#allocation5 + $0x160] sm:$0xff]
    %v343 = vld [vmem:[#allocation5 + $0x168] sm:$0xff]
    %v344 = vld [vmem:[#allocation5 + $0x170] sm:$0xff]
    %v345 = vld [vmem:[#allocation5 + $0x178] sm:$0xff]
    %v346 = vld [vmem:[#allocation5 + $0x180] sm:$0xff]
    %v347 = vld [vmem:[#allocation5 + $0x188] sm:$0xff]
    %v348 = vld [vmem:[#allocation5 + $0x190] sm:$0xff]
    %v349 = vld [vmem:[#allocation5 + $0x198] sm:$0xff]
    %v350 = vld [vmem:[#allocation5 + $0x1a0] sm:$0xff]
    %v351 = vld [vmem:[#allocation5 + $0x1a8] sm:$0xff]
    %v352 = vld [vmem:[#allocation5 + $0x1b0] sm:$0xff]
    %v353 = vld [vmem:[#allocation5 + $0x1b8] sm:$0xff]
    %v354 = vld [vmem:[#allocation5 + $0x1c0] sm:$0xff]
    %v355 = vld [vmem:[#allocation5 + $0x1c8] sm:$0xff]
    %v356 = vld [vmem:[#allocation5 + $0x1d0] sm:$0xff]
    %v357 = vld [vmem:[#allocation5 + $0x1d8] sm:$0xff]
    %v358 = vld [vmem:[#allocation5 + $0x1e0] sm:$0xff]
    %v359 = vld [vmem:[#allocation5 + $0x1e8] sm:$0xff]
    %v360 = vld [vmem:[#allocation5 + $0x1f0] sm:$0xff]
    %v361 = vld [vmem:[#allocation5 + $0x1f8] sm:$0xff]
    %v362 = vld [vmem:[%s6] sm:$0xf]
    %v364 = vperm.slane %v362, 0
    %v365 = vperm.slane %v362, 1
    %v366 = vperm.slane %v362, 2
    %v367 = vperm.slane %v362, 3
    %v373 = vunpack.c.l.b16 %v45
    %v374 = vunpack.c.h.b16 %v45
    %v375 = vpack.c.b16 %v373, %v373
    %v376 = vpack.c.b16 %v374, %v374
    %v443 = vunpack.c.l.b16 %v298
    %v444 = vunpack.c.h.b16 %v298
    %v445 = vunpack.c.l.b16 %v299
    %v446 = vunpack.c.h.b16 %v299
    %v447 = vunpack.c.l.b16 %v300
    %v448 = vunpack.c.h.b16 %v300
    %v449 = vunpack.c.l.b16 %v301
    %v450 = vunpack.c.h.b16 %v301
    %v451 = vunpack.c.l.b16 %v302
    %v452 = vunpack.c.h.b16 %v302
    %v453 = vunpack.c.l.b16 %v303
    %v454 = vunpack.c.h.b16 %v303
    %v455 = vunpack.c.l.b16 %v304
    %v456 = vunpack.c.h.b16 %v304
    %v457 = vunpack.c.l.b16 %v305
    %v458 = vunpack.c.h.b16 %v305
    %v459 = vunpack.c.l.b16 %v306
    %v460 = vunpack.c.h.b16 %v306
    %v461 = vunpack.c.l.b16 %v307
    %v462 = vunpack.c.h.b16 %v307
    %v463 = vunpack.c.l.b16 %v308
    %v464 = vunpack.c.h.b16 %v308
    %v465 = vunpack.c.l.b16 %v309
    %v466 = vunpack.c.h.b16 %v309
    %v467 = vunpack.c.l.b16 %v310
    %v468 = vunpack.c.h.b16 %v310
    %v469 = vunpack.c.l.b16 %v311
    %v470 = vunpack.c.h.b16 %v311
    %v471 = vunpack.c.l.b16 %v312
    %v472 = vunpack.c.h.b16 %v312
    %v473 = vunpack.c.l.b16 %v313
    %v474 = vunpack.c.h.b16 %v313
    %v475 = vunpack.c.l.b16 %v314
    %v476 = vunpack.c.h.b16 %v314
    %v477 = vunpack.c.l.b16 %v315
    %v478 = vunpack.c.h.b16 %v315
    %v479 = vunpack.c.l.b16 %v316
    %v480 = vunpack.c.h.b16 %v316
    %v481 = vunpack.c.l.b16 %v317
    %v482 = vunpack.c.h.b16 %v317
    %v483 = vunpack.c.l.b16 %v318
    %v484 = vunpack.c.h.b16 %v318
    %v485 = vunpack.c.l.b16 %v319
    %v486 = vunpack.c.h.b16 %v319
    %v487 = vunpack.c.l.b16 %v320
    %v488 = vunpack.c.h.b16 %v320
    %v489 = vunpack.c.l.b16 %v321
    %v490 = vunpack.c.h.b16 %v321
    %v491 = vunpack.c.l.b16 %v322
    %v492 = vunpack.c.h.b16 %v322
    %v493 = vunpack.c.l.b16 %v323
    %v494 = vunpack.c.h.b16 %v323
    %v495 = vunpack.c.l.b16 %v324
    %v496 = vunpack.c.h.b16 %v324
    %v497 = vunpack.c.l.b16 %v325
    %v498 = vunpack.c.h.b16 %v325
    %v499 = vunpack.c.l.b16 %v326
    %v500 = vunpack.c.h.b16 %v326
    %v501 = vunpack.c.l.b16 %v327
    %v502 = vunpack.c.h.b16 %v327
    %v503 = vunpack.c.l.b16 %v328
    %v504 = vunpack.c.h.b16 %v328
    %v505 = vunpack.c.l.b16 %v329
    %v506 = vunpack.c.h.b16 %v329
    %v507 = vunpack.c.l.b16 %v330
    %v508 = vunpack.c.h.b16 %v330
    %v509 = vunpack.c.l.b16 %v331
    %v510 = vunpack.c.h.b16 %v331
    %v511 = vunpack.c.l.b16 %v332
    %v512 = vunpack.c.h.b16 %v332
    %v513 = vunpack.c.l.b16 %v333
    %v514 = vunpack.c.h.b16 %v333
    %v515 = vunpack.c.l.b16 %v334
    %v516 = vunpack.c.h.b16 %v334
    %v517 = vunpack.c.l.b16 %v335
    %v518 = vunpack.c.h.b16 %v335
    %v519 = vunpack.c.l.b16 %v336
    %v520 = vunpack.c.h.b16 %v336
    %v521 = vunpack.c.l.b16 %v337
    %v522 = vunpack.c.h.b16 %v337
    %v523 = vunpack.c.l.b16 %v338
    %v524 = vunpack.c.h.b16 %v338
    %v525 = vunpack.c.l.b16 %v339
    %v526 = vunpack.c.h.b16 %v339
    %v527 = vunpack.c.l.b16 %v340
    %v528 = vunpack.c.h.b16 %v340
    %v529 = vunpack.c.l.b16 %v341
    %v530 = vunpack.c.h.b16 %v341
    %v531 = vunpack.c.l.b16 %v342
    %v532 = vunpack.c.h.b16 %v342
    %v533 = vunpack.c.l.b16 %v343
    %v534 = vunpack.c.h.b16 %v343
    %v535 = vunpack.c.l.b16 %v344
    %v536 = vunpack.c.h.b16 %v344
    %v537 = vunpack.c.l.b16 %v345
    %v538 = vunpack.c.h.b16 %v345
    %v539 = vunpack.c.l.b16 %v346
    %v540 = vunpack.c.h.b16 %v346
    %v541 = vunpack.c.l.b16 %v347
    %v542 = vunpack.c.h.b16 %v347
    %v543 = vunpack.c.l.b16 %v348
    %v544 = vunpack.c.h.b16 %v348
    %v545 = vunpack.c.l.b16 %v349
    %v546 = vunpack.c.h.b16 %v349
    %v547 = vunpack.c.l.b16 %v350
    %v548 = vunpack.c.h.b16 %v350
    %v549 = vunpack.c.l.b16 %v351
    %v550 = vunpack.c.h.b16 %v351
    %v551 = vunpack.c.l.b16 %v352
    %v552 = vunpack.c.h.b16 %v352
    %v553 = vunpack.c.l.b16 %v353
    %v554 = vunpack.c.h.b16 %v353
    %v555 = vunpack.c.l.b16 %v354
    %v556 = vunpack.c.h.b16 %v354
    %v557 = vunpack.c.l.b16 %v355
    %v558 = vunpack.c.h.b16 %v355
    %v559 = vunpack.c.l.b16 %v356
    %v560 = vunpack.c.h.b16 %v356
    %v561 = vunpack.c.l.b16 %v357
    %v562 = vunpack.c.h.b16 %v357
    %v563 = vunpack.c.l.b16 %v358
    %v564 = vunpack.c.h.b16 %v358
    %v565 = vunpack.c.l.b16 %v359
    %v566 = vunpack.c.h.b16 %v359
    %v567 = vunpack.c.l.b16 %v360
    %v568 = vunpack.c.h.b16 %v360
    %v569 = vunpack.c.l.b16 %v361
    %v570 = vunpack.c.h.b16 %v361
    %v571 = vpack.c.b16 %v447, %v443
    %v572 = vpack.c.b16 %v448, %v444
    %v573 = vpack.c.b16 %v449, %v445
    %v574 = vpack.c.b16 %v450, %v446
    %v575 = vpack.c.b16 %v455, %v451
    %v576 = vpack.c.b16 %v456, %v452
    %v577 = vpack.c.b16 %v457, %v453
    %v578 = vpack.c.b16 %v458, %v454
    %v579 = vpack.c.b16 %v463, %v459
    %v580 = vpack.c.b16 %v464, %v460
    %v581 = vpack.c.b16 %v465, %v461
    %v582 = vpack.c.b16 %v466, %v462
    %v583 = vpack.c.b16 %v471, %v467
    %v584 = vpack.c.b16 %v472, %v468
    %v585 = vpack.c.b16 %v473, %v469
    %v586 = vpack.c.b16 %v474, %v470
    %v587 = vpack.c.b16 %v479, %v475
    %v588 = vpack.c.b16 %v480, %v476
    %v589 = vpack.c.b16 %v481, %v477
    %v590 = vpack.c.b16 %v482, %v478
    %v591 = vpack.c.b16 %v487, %v483
    %v592 = vpack.c.b16 %v488, %v484
    %v593 = vpack.c.b16 %v489, %v485
    %v594 = vpack.c.b16 %v490, %v486
    %v595 = vpack.c.b16 %v495, %v491
    %v596 = vpack.c.b16 %v496, %v492
    %v597 = vpack.c.b16 %v497, %v493
    %v598 = vpack.c.b16 %v498, %v494
    %v599 = vpack.c.b16 %v503, %v499
    %v600 = vpack.c.b16 %v504, %v500
    %v601 = vpack.c.b16 %v505, %v501
    %v602 = vpack.c.b16 %v506, %v502
    %v603 = vpack.c.b16 %v511, %v507
    %v604 = vpack.c.b16 %v512, %v508
    %v605 = vpack.c.b16 %v513, %v509
    %v606 = vpack.c.b16 %v514, %v510
    %v607 = vpack.c.b16 %v519, %v515
    %v608 = vpack.c.b16 %v520, %v516
    %v609 = vpack.c.b16 %v521, %v517
    %v610 = vpack.c.b16 %v522, %v518
    %v611 = vpack.c.b16 %v527, %v523
    %v612 = vpack.c.b16 %v528, %v524
    %v613 = vpack.c.b16 %v529, %v525
    %v614 = vpack.c.b16 %v530, %v526
    %v615 = vpack.c.b16 %v535, %v531
    %v616 = vpack.c.b16 %v536, %v532
    %v617 = vpack.c.b16 %v537, %v533
    %v618 = vpack.c.b16 %v538, %v534
    %v619 = vpack.c.b16 %v543, %v539
    %v620 = vpack.c.b16 %v544, %v540
    %v621 = vpack.c.b16 %v545, %v541
    %v622 = vpack.c.b16 %v546, %v542
    %v623 = vpack.c.b16 %v551, %v547
    %v624 = vpack.c.b16 %v552, %v548
    %v625 = vpack.c.b16 %v553, %v549
    %v626 = vpack.c.b16 %v554, %v550
    %v627 = vpack.c.b16 %v559, %v555
    %v628 = vpack.c.b16 %v560, %v556
    %v629 = vpack.c.b16 %v561, %v557
    %v630 = vpack.c.b16 %v562, %v558
    %v631 = vpack.c.b16 %v567, %v563
    %v632 = vpack.c.b16 %v568, %v564
    %v633 = vpack.c.b16 %v569, %v565
    %v634 = vpack.c.b16 %v570, %v566
    %699 = vmatpush.bf16.msra.mxu0 %v599
    %700 = vmatpush.bf16.msra.mxu0 %v595
    %701 = vmatpush.bf16.msra.mxu0 %v591
    %702 = vmatpush.bf16.msra.mxu0 %v587
    %703 = vmatpush.bf16.msra.mxu0 %v583
    %704 = vmatpush.bf16.msra.mxu0 %v579
    %705 = vmatpush.bf16.msra.mxu0 %v575
    %706 = vmatpush.bf16.msra.mxu0 %v571
    %707 = vmatmul.bf16.gmra.mxu0 %v375
    %v708 = vpop.f32.mrf.mxu0
    %v709 = vadd.f32 %v364, %v708
    %v710 = vpop.f32.mrf.mxu0
    %711 = vdwg.mxu0
    %712 = vmatpush.bf16.msra.mxu0 %v631
    %713 = vmatpush.bf16.msra.mxu0 %v627
    %714 = vmatpush.bf16.msra.mxu0 %v623
    %715 = vmatpush.bf16.msra.mxu0 %v619
    %716 = vmatpush.bf16.msra.mxu0 %v615
    %717 = vmatpush.bf16.msra.mxu0 %v611
    %718 = vmatpush.bf16.msra.mxu0 %v607
    %719 = vmatpush.bf16.msra.mxu0 %v603
    %720 = vmatmul.bf16.gmra.mxu0 %v376
    %v721 = vpop.f32.mrf.mxu0
    %v722 = vadd.f32 %v709, %v721
    %v723 = vpop.f32.mrf.mxu0
    %724 = vdwg.mxu0
    %725 = vmatpush.bf16.msra.mxu0 %v600
    %726 = vmatpush.bf16.msra.mxu0 %v596
    %727 = vmatpush.bf16.msra.mxu0 %v592
    %728 = vmatpush.bf16.msra.mxu0 %v588
    %729 = vmatpush.bf16.msra.mxu0 %v584
    %730 = vmatpush.bf16.msra.mxu0 %v580
    %731 = vmatpush.bf16.msra.mxu0 %v576
    %732 = vmatpush.bf16.msra.mxu0 %v572
    %733 = vmatmul.bf16.gmra.mxu0 %v375
    %v734 = vpop.f32.mrf.mxu0
    %v735 = vadd.f32 %v365, %v734
    %v736 = vpop.f32.mrf.mxu0
    %737 = vdwg.mxu0
    %738 = vmatpush.bf16.msra.mxu0 %v632
    %739 = vmatpush.bf16.msra.mxu0 %v628
    %740 = vmatpush.bf16.msra.mxu0 %v624
    %741 = vmatpush.bf16.msra.mxu0 %v620
    %742 = vmatpush.bf16.msra.mxu0 %v616
    %743 = vmatpush.bf16.msra.mxu0 %v612
    %744 = vmatpush.bf16.msra.mxu0 %v608
    %745 = vmatpush.bf16.msra.mxu0 %v604
    %746 = vmatmul.bf16.gmra.mxu0 %v376
    %v747 = vpop.f32.mrf.mxu0
    %v748 = vadd.f32 %v735, %v747
    %v749 = vpop.f32.mrf.mxu0
    %750 = vdwg.mxu0
    %751 = vmatpush.bf16.msra.mxu0 %v601
    %752 = vmatpush.bf16.msra.mxu0 %v597
    %753 = vmatpush.bf16.msra.mxu0 %v593
    %754 = vmatpush.bf16.msra.mxu0 %v589
    %755 = vmatpush.bf16.msra.mxu0 %v585
    %756 = vmatpush.bf16.msra.mxu0 %v581
    %757 = vmatpush.bf16.msra.mxu0 %v577
    %758 = vmatpush.bf16.msra.mxu0 %v573
    %759 = vmatmul.bf16.gmra.mxu0 %v375
    %v760 = vpop.f32.mrf.mxu0
    %v761 = vadd.f32 %v366, %v760
    %v762 = vpop.f32.mrf.mxu0
    %763 = vdwg.mxu0
    %764 = vmatpush.bf16.msra.mxu0 %v633
    %765 = vmatpush.bf16.msra.mxu0 %v629
    %766 = vmatpush.bf16.msra.mxu0 %v625
    %767 = vmatpush.bf16.msra.mxu0 %v621
    %768 = vmatpush.bf16.msra.mxu0 %v617
    %769 = vmatpush.bf16.msra.mxu0 %v613
    %770 = vmatpush.bf16.msra.mxu0 %v609
    %771 = vmatpush.bf16.msra.mxu0 %v605
    %772 = vmatmul.bf16.gmra.mxu0 %v376
    %v773 = vpop.f32.mrf.mxu0
    %v774 = vadd.f32 %v761, %v773
    %v775 = vpop.f32.mrf.mxu0
    %776 = vdwg.mxu0
    %777 = vmatpush.bf16.msra.mxu0 %v602
    %778 = vmatpush.bf16.msra.mxu0 %v598
    %779 = vmatpush.bf16.msra.mxu0 %v594
    %780 = vmatpush.bf16.msra.mxu0 %v590
    %781 = vmatpush.bf16.msra.mxu0 %v586
    %782 = vmatpush.bf16.msra.mxu0 %v582
    %783 = vmatpush.bf16.msra.mxu0 %v578
    %784 = vmatpush.bf16.msra.mxu0 %v574
    %785 = vmatmul.bf16.gmra.mxu0 %v375
    %v786 = vpop.f32.mrf.mxu0
    %v787 = vadd.f32 %v367, %v786
    %v788 = vpop.f32.mrf.mxu0
    %789 = vdwg.mxu0
    %790 = vmatpush.bf16.msra.mxu0 %v634
    %791 = vmatpush.bf16.msra.mxu0 %v630
    %792 = vmatpush.bf16.msra.mxu0 %v626
    %793 = vmatpush.bf16.msra.mxu0 %v622
    %794 = vmatpush.bf16.msra.mxu0 %v618
    %795 = vmatpush.bf16.msra.mxu0 %v614
    %796 = vmatpush.bf16.msra.mxu0 %v610
    %797 = vmatpush.bf16.msra.mxu0 %v606
    %798 = vmatmul.bf16.gmra.mxu0 %v376
    %v799 = vpop.f32.mrf.mxu0
    %v800 = vadd.f32 %v787, %v799
    %v801 = vpop.f32.mrf.mxu0
    %802 = vdwg.mxu0
    %v803 = vld [vmem:[#allocation2] sm:$0xff]
    %v804 = vmax.f32 %v722, %v748
    %v805 = vmax.f32 %v774, %v800
    %v806 = vmax.f32 %v804, %v805
    %807 = vmax.xlane.f32.xlu0 %v806
    %v808 = vpop.xlane.xlu0 %807
    %v809 = vmax.f32 %v803, %v808
    %v810 = vsub.f32 %v803, %v809
    %v811 = vmul.f32 %v810, 1.442695
    %v812 = vpow.pop %v811
    %v813 = vld [vmem:[#allocation3] sm:$0xff]
    %v814 = vmul.f32 %v812, %v813
    %816 = vset.pattern.permute.xlu0 0
    %817 = vperm.xlu0 %816, %v809
    %v818 = vpop.permute.xlu0 %817
    %v820 = vsub.f32 %v722, %v818
    %v821 = vsub.f32 %v748, %v818
    %v822 = vsub.f32 %v774, %v818
    %v823 = vsub.f32 %v800, %v818
    %v824 = vmul.f32 %v820, 1.442695
    %v825 = vpow.pop %v824
    %v826 = vmul.f32 %v821, 1.442695
    %v827 = vpow.pop %v826
    %v828 = vmul.f32 %v822, 1.442695
    %v829 = vpow.pop %v828
    %v830 = vmul.f32 %v823, 1.442695
    %v831 = vpow.pop %v830
    %v832 = vadd.f32 %v825, %v827
    %v833 = vadd.f32 %v832, %v829
    %v834 = vadd.f32 %v833, %v831
    %835 = vadd.xlane.f32.xlu0 %v834
    %v836 = vpop.xlane.xlu0 %835
    %v837 = vadd.f32 %v814, %v836
    %vm838 = vcmask 7168
    %839 = vst.msk [vmem:[#allocation3] sm:$0xff] %vm838, %v837
    %840 = vst.msk [vmem:[#allocation2] sm:$0xff] %vm838, %v809
    %v841 = vlaneseq
    %v842 = vand.u32 %v841, 127
    %v843 = vadd.s32 %v842, 128
    %v844 = vadd.s32 %v842, 256
    %v845 = vadd.s32 %v842, 384
    %s846 = smul.u32 0, 512
    %v847 = vstv %s846
    %v848 = vadd.s32 %v842, %v847
    %v849 = vadd.s32 %v843, %v847
    %v850 = vadd.s32 %v844, %v847
    %v851 = vadd.s32 %v845, %v847
    %v852 = vld [vmem:[#allocation4] sm:$0xff]
    %v853 = vld [vmem:[%s1] sm:$0xff]
    %854 = vset.pattern.permute.xlu0 0
    %855 = vperm.xlu0 %854, %v853
    %v856 = vpop.permute.xlu0 %855
    %vm857 = vcmp.eq.s32.totalorder %v848, %v856
    %vm858 = vcmp.eq.s32.totalorder %v849, %v856
    %vm859 = vcmp.eq.s32.totalorder %v850, %v856
    %vm860 = vcmp.eq.s32.totalorder %v851, %v856
    %v861 = vsel %vm857, %v722, 0.0
    %v862 = vsel %vm858, %v748, 0.0
    %v863 = vsel %vm859, %v774, 0.0
    %v864 = vsel %vm860, %v800, 0.0
    %v865 = vadd.f32 %v861, %v862
    %v866 = vadd.f32 %v865, %v863
    %v867 = vadd.f32 %v866, %v864
    %868 = vadd.xlane.f32.xlu0 %v867
    %v869 = vpop.xlane.xlu0 %868
    %v870 = vadd.f32 %v852, %v869
    %871 = vst.msk [vmem:[#allocation4] sm:$0xff] %vm838, %v870
    // Predicated region
    $region38: #{tpu_custom_call.1} parent=1 // pred_check
      %p872 = pneg %p46
    $region39: #{tpu_custom_call.1} parent=1 // pred_check_branch
      %874 = sbr.rel (%p872) target = $region41
    $region40: #{tpu_custom_call.1} parent=1 // pred_region
      %v875 = vld [vmem:[#allocation2] sm:$0xff]
      %v876 = vld [vmem:[#allocation3] sm:$0xff]
      %v877 = vlog2.pop %v876
      %v878 = vmul.f32 %v877, 0.6931472
      %v879 = vadd.f32 %v875, %v878
      %v880 = vld [vmem:[#allocation4] sm:$0xff]
      %v881 = vsub.f32 %v879, %v880
      %882 = vst.msk [vmem:[%s8] sm:$0xff] %vm838, %v881
    $region41: #{tpu_custom_call.1} parent=1 // pred_fallthru
      _
    // Predicated region
    $region42: #{tpu_custom_call.1} parent=1 // pred_check
      _
    $region43: #{tpu_custom_call.1} parent=1 // pred_check_branch
      %884 = sbr.rel (0) target = $region45
    $region44: #{tpu_custom_call.1} parent=1 // pred_region
      _
    $region45: #{tpu_custom_call.1} parent=1 // pred_fallthru
      _
    // Predicated region
    $region46: #{tpu_custom_call.1} parent=1 // pred_check
      _
    $region47: #{tpu_custom_call.1} parent=1 // pred_check_branch
      %886 = sbr.rel (0) target = $region49
    $region48: #{tpu_custom_call.1} parent=1 // pred_region
      _
    $region49: #{tpu_custom_call.1} parent=1 // pred_fallthru
      _
    // Predicated region
    $region50: #{tpu_custom_call.1} parent=1 // pred_check
      _
    $region51: #{tpu_custom_call.1} parent=1 // pred_check_branch
      %888 = sbr.rel (0) target = $region53
    $region52: #{tpu_custom_call.1} parent=1 // pred_region
      _
    $region53: #{tpu_custom_call.1} parent=1 // pred_fallthru
      _
    // Predicated region
    $region54: #{tpu_custom_call.1} parent=1 // pred_check
      _
    $region55: #{tpu_custom_call.1} parent=1 // pred_check_branch
      %890 = sbr.rel (0) target = $region57
    $region56: #{tpu_custom_call.1} parent=1 // pred_region
      _
    $region57: #{tpu_custom_call.1} parent=1 // pred_fallthru
      _
    %891 = vsyncpa [#allocation6], 1

</llo_original>
